<compile_context>
chip_gen: v6e
topology: v6e:2x2x1
jax: 0.10.0
libtpu: 0.0.40
codegen_flags: <defaults>
</compile_context>

<pallas_src>
import functools
import math

import jax
import jax.numpy as jnp
from jax.experimental import pallas as pl
from jax.experimental.pallas import tpu as pltpu

_NEG_SLOPE = 0.1          # matches nn.LeakyReLU(negative_slope=0.1) in the module
_LANE = 128


def _round_up(n, m=_LANE):
    return ((n + m - 1) // m) * m


def _leaky_relu(v):
    return jnp.where(v >= 0, v, jnp.float32(_NEG_SLOPE) * v)


def _bf16(v):
    return v.astype(jnp.bfloat16)


# -----------------------------------------------------------------------------
# Fused whole-forward kernel.  `nonlinear` / `long` / `have_noise_h` are static
# structure flags.  Ref layout:
#   x, [noise_h], w1, b1, w2, b2, (wshort, bshort | w3, b3, w4, b4, w5, b5),
#   out_ref, h1_ref
# -----------------------------------------------------------------------------
def _mlp_fused_kernel(x_ref, *rest, nonlinear, long, have_noise_h):
    i = 1 if have_noise_h else 0
    nh_ref = rest[0] if have_noise_h else None
    w1_ref, b1_ref, w2_ref, b2_ref = rest[i:i + 4]
    tail = rest[i + 4:]
    out_ref, h1_ref = tail[-2], tail[-1]

    # fc1 on (already-noised) input; bf16 operands, f32 accumulate on the MXU.
    x = x_ref[...]
    h1 = jnp.dot(_bf16(x), w1_ref[...],
                 preferred_element_type=jnp.float32) + b1_ref[...]
    if nonlinear:
        h1 = _leaky_relu(h1)
    h1_ref[...] = h1                      # clean h1 (pre-noise), lane-dense store

    # fc2 on noisy h1 (padded lanes of h1/noise hit zero rows of w2 -> inert).
    nh1 = h1 + nh_ref[...] if have_noise_h else h1
    h2 = _leaky_relu(jnp.dot(_bf16(nh1), w2_ref[...],
                             preferred_element_type=jnp.float32) + b2_ref[...])

    if long:
        w3_ref, b3_ref, w4_ref, b4_ref, w5_ref, b5_ref = tail[:6]
        h3 = _leaky_relu(jnp.dot(_bf16(h2), w3_ref[...],
                                 preferred_element_type=jnp.float32) + b3_ref[...])
        h4 = _leaky_relu(jnp.dot(_bf16(h3), w4_ref[...],
                                 preferred_element_type=jnp.float32) + b4_ref[...])
        out = jnp.dot(_bf16(h4), w5_ref[...],
                      preferred_element_type=jnp.float32) + b5_ref[...]
    else:
        ws_ref, bs_ref = tail[:2]
        out = jnp.dot(_bf16(h2), ws_ref[...],
                      preferred_element_type=jnp.float32) + bs_ref[...]

    out_ref[...] = out                    # lane-dense (padded) store


# -----------------------------------------------------------------------------
# Parameter init, mimicking nn.Linear default init U(-1/sqrt(fan_in), +...).
# Weights stored (in, out), zero-padded to 128-multiples, cast to bf16 (MXU fast
# path; padding zeros are exact in bf16).  Biases stay f32 (elementwise add).
# -----------------------------------------------------------------------------
def _init_linear_padded(key, fan_in, fan_out, in_pad, out_pad):
    bound = 1.0 / math.sqrt(fan_in)
    kw, kb = jax.random.split(key)
    w = jax.random.uniform(kw, (fan_in, fan_out), jnp.float32, -bound, bound)
    b = jax.random.uniform(kb, (fan_out,), jnp.float32, -bound, bound)
    wp = jnp.zeros((in_pad, out_pad), jnp.float32).at[:fan_in, :fan_out].set(w)
    bp = jnp.zeros((1, out_pad), jnp.float32).at[:, :fan_out].set(b)
    return wp.astype(jnp.bfloat16), bp


def init_mlp_params(key, input_size, hidden_size, second_layer, num_classes, mid=50):
    Hp, Sp, Mp, Cp = (_round_up(hidden_size), _round_up(second_layer),
                      _round_up(mid), _round_up(num_classes))
    keys = jax.random.split(key, 6)
    p = {}
    p["w1"], p["b1"] = _init_linear_padded(keys[0], input_size, hidden_size, input_size, Hp)
    p["w2"], p["b2"] = _init_linear_padded(keys[1], hidden_size, second_layer, Hp, Sp)
    p["wshort"], p["bshort"] = _init_linear_padded(keys[2], second_layer, num_classes, Sp, Cp)
    p["w3"], p["b3"] = _init_linear_padded(keys[3], second_layer, second_layer, Sp, Sp)
    p["w4"], p["b4"] = _init_linear_padded(keys[4], second_layer, mid, Sp, Mp)
    p["w5"], p["b5"] = _init_linear_padded(keys[5], mid, num_classes, Mp, Cp)
    p["dims"] = {"input": input_size, "hidden": hidden_size,
                 "second": second_layer, "mid": mid, "classes": num_classes}
    return p


# -----------------------------------------------------------------------------
# Noise generation (exact Gaussian, matches torch.randn_like semantics).
# Statically gated on std != 0 so eval calls skip it entirely.
# -----------------------------------------------------------------------------
def _make_noise(key, noise_std, x, h_pad):
    std0, std1 = float(noise_std[0]), float(noise_std[1])
    k0, k1 = jax.random.split(key)
    x_noisy = x if std0 == 0.0 else x + std0 * jax.random.normal(k0, x.shape, jnp.float32)
    noise_h = (None if std1 == 0.0
               else std1 * jax.random.normal(k1, (x.shape[0], h_pad), jnp.float32))
    return x_noisy, noise_h


# -----------------------------------------------------------------------------
# Forward pass (matches MLP.forward): returns (out, h1).
# -----------------------------------------------------------------------------
def mlp_forward(params, x, key, noise_std, *, nonlinear=True, long=0, batch_tile=128):
    d = params["dims"]
    B, IN = x.shape
    Hp = params["w1"].shape[1]
    Sp = params["w2"].shape[1]
    Mp = params["w4"].shape[1]
    Cp = params["bshort"].shape[1]

    x_noisy, noise_h = _make_noise(key, noise_std, x, Hp)
    have_nh = noise_h is not None

    if long:
        weights = (params["w1"], params["b1"], params["w2"], params["b2"],
                   params["w3"], params["b3"], params["w4"], params["b4"],
                   params["w5"], params["b5"])
        mm_cols = IN * Hp + Hp * Sp + Sp * Sp + Sp * Mp + Mp * Cp
    else:
        weights = (params["w1"], params["b1"], params["w2"], params["b2"],
                   params["wshort"], params["bshort"])
        mm_cols = IN * Hp + Hp * Sp + Sp * Cp

    kernel = functools.partial(_mlp_fused_kernel, nonlinear=bool(nonlinear),
                               long=int(bool(long)), have_noise_h=have_nh)

    if B <= batch_tile:
        # Tiny batch: single grid-less invocation, everything resident in VMEM.
        inputs = (x_noisy,) + ((noise_h,) if have_nh else ()) + weights
        cost = pl.CostEstimate(
            flops=2 * B * mm_cols, transcendentals=0,
            bytes_accessed=int(sum(a.size * a.dtype.itemsize for a in inputs)
                               + 4 * B * (Cp + Hp)))
        out_p, h1_p = pl.pallas_call(
            kernel,
            out_shape=(jax.ShapeDtypeStruct((B, Cp), jnp.float32),
                       jax.ShapeDtypeStruct((B, Hp), jnp.float32)),
            cost_estimate=cost,
        )(*inputs)
        return out_p[:, :d["classes"]], h1_p[:, :d["hidden"]]

    # Training-scale batch: grid over batch tiles.  x / noise / outputs are tiled
    # (auto double-buffered), weights use constant index_maps so they are fetched
    # once and stay resident.  "parallel" lets v7x split tiles across its 2 TCs.
    TB = batch_tile
    Bp = _round_up(B, TB)
    xp = jnp.pad(x_noisy, ((0, Bp - B), (0, 0)))
    in_list = [xp]
    in_specs = [pl.BlockSpec((TB, IN), lambda i: (i, 0))]
    if have_nh:
        in_list.append(jnp.pad(noise_h, ((0, Bp - B), (0, 0))))
        in_specs.append(pl.BlockSpec((TB, Hp), lambda i: (i, 0)))
    for wgt in weights:
        in_list.append(wgt)
        in_specs.append(pl.BlockSpec(wgt.shape, lambda i: (0, 0)))

    cost = pl.CostEstimate(
        flops=2 * Bp * mm_cols, transcendentals=0,
        bytes_accessed=int(sum(a.size * a.dtype.itemsize for a in in_list)
                           + 4 * Bp * (Cp + Hp)))

    out_p, h1_p = pl.pallas_call(
        kernel,
        grid=(Bp // TB,),
        in_specs=in_specs,
        out_specs=(pl.BlockSpec((TB, Cp), lambda i: (i, 0)),
                   pl.BlockSpec((TB, Hp), lambda i: (i, 0))),
        out_shape=(jax.ShapeDtypeStruct((Bp, Cp), jnp.float32),
                   jax.ShapeDtypeStruct((Bp, Hp), jnp.float32)),
        compiler_params=pltpu.CompilerParams(dimension_semantics=("parallel",)),
        cost_estimate=cost,
    )(*in_list)
    return out_p[:B, :d["classes"]], h1_p[:B, :d["hidden"]]


# -----------------------------------------------------------------------------
# Pure-JAX reference (same noise arrays, same bf16-at-the-dot numerics).
# -----------------------------------------------------------------------------
def _ref_forward(params, x_noisy, noise_h, *, nonlinear, long):
    d = params["dims"]
    H, S, M, C = d["hidden"], d["second"], d["mid"], d["classes"]
    lr = lambda v: jnp.where(v >= 0, v, _NEG_SLOPE * v)
    dot = lambda a, w: jnp.dot(a.astype(jnp.bfloat16), w,
                               preferred_element_type=jnp.float32)
    h1 = dot(x_noisy, params["w1"][:, :H]) + params["b1"][0, :H]
    if nonlinear:
        h1 = lr(h1)
    nh1 = h1 if noise_h is None else h1 + noise_h[:, :H]
    h2 = lr(dot(nh1, params["w2"][:H, :S]) + params["b2"][0, :S])
    if long:
        h3 = lr(dot(h2, params["w3"][:S, :S]) + params["b3"][0, :S])
        h4 = lr(dot(h3, params["w4"][:S, :M]) + params["b4"][0, :M])
        out = dot(h4, params["w5"][:M, :C]) + params["b5"][0, :C]
    else:
        out = dot(h2, params["wshort"][:S, :C]) + params["bshort"][0, :C]
    return out, h1


if __name__ == "__main__":
    batch = 8
    input_size = 64
    hidden_size = 32
    second_layer = 32
    num_classes = 10
    noise_std = (0.1, 0.05)

    root = jax.random.PRNGKey(0)
    k_params, k_x, k_noise, k_xbig, k_nbig = jax.random.split(root, 5)
    params = init_mlp_params(k_params, input_size, hidden_size, second_layer, num_classes)
    x = jax.random.normal(k_x, (batch, input_size), jnp.float32)
    Hp = params["w1"].shape[1]

    # 1) small batch, grid-less, noisy, short path
    out_s, h1_s = mlp_forward(params, x, k_noise, noise_std, nonlinear=True, long=0)
    # 2) small batch, grid-less, noisy, long path
    out_l, h1_l = mlp_forward(params, x, k_noise, noise_std, nonlinear=True, long=1)
    # 3) zero-noise (eval): noise work statically skipped, same kernel structure
    out_0, h1_0 = mlp_forward(params, x, k_noise, (0.0, 0.0), nonlinear=True, long=0)
    # 4) larger batch: batch-tiled grid path with parallel semantics (+ padding)
    xb = jax.random.normal(k_xbig, (200, input_size), jnp.float32)
    out_b, h1_b = mlp_forward(params, xb, k_nbig, noise_std, nonlinear=True, long=0,
                              batch_tile=64)

    jax.block_until_ready((out_s, h1_s, out_l, h1_l, out_0, h1_0, out_b, h1_b))

    # References built from the exact same noise draws.
    xn, nh = _make_noise(k_noise, noise_std, x, Hp)
    ref_s = _ref_forward(params, xn, nh, nonlinear=True, long=0)
    ref_l = _ref_forward(params, xn, nh, nonlinear=True, long=1)
    ref_0 = _ref_forward(params, x, None, nonlinear=True, long=0)
    xnb, nhb = _make_noise(k_nbig, noise_std, xb, Hp)
    ref_b = _ref_forward(params, xnb, nhb, nonlinear=True, long=0)

    assert out_s.shape == (batch, num_classes) and h1_s.shape == (batch, hidden_size)
    assert out_l.shape == (batch, num_classes) and h1_l.shape == (batch, hidden_size)
    assert out_b.shape == (200, num_classes) and h1_b.shape == (200, hidden_size)

    checks = [(out_s, ref_s[0]), (h1_s, ref_s[1]),
              (out_l, ref_l[0]), (h1_l, ref_l[1]),
              (out_0, ref_0[0]), (h1_0, ref_0[1]),
              (out_b, ref_b[0]), (h1_b, ref_b[1])]
    for got, want in checks:
        err = float(jnp.max(jnp.abs(got - want)))
        assert jnp.allclose(got, want, rtol=2e-2, atol=2e-2), err
        assert bool(jnp.all(jnp.isfinite(got)))

    print("KERNEL_OK")
</pallas_src>

<mosaic_0001>
module attributes {stable_mosaic.version = 11 : i64} {
  func.func @_mlp_fused_kernel(%arg0: memref<8x64xf32, #tpu.memory_space<vmem>>, %arg1: memref<8x128xf32, #tpu.memory_space<vmem>>, %arg2: memref<64x128xbf16, #tpu.memory_space<vmem>>, %arg3: memref<1x128xf32, #tpu.memory_space<vmem>>, %arg4: memref<128x128xbf16, #tpu.memory_space<vmem>>, %arg5: memref<1x128xf32, #tpu.memory_space<vmem>>, %arg6: memref<128x128xbf16, #tpu.memory_space<vmem>>, %arg7: memref<1x128xf32, #tpu.memory_space<vmem>>, %arg8: memref<8x128xf32, #tpu.memory_space<vmem>>, %arg9: memref<8x128xf32, #tpu.memory_space<vmem>>) attributes {dimension_semantics = [], scalar_prefetch = 0 : i64, scratch_operands = 0 : i64, tpu.core_type = #tpu.core_type<tc>} {
    %c0 = arith.constant 0 : index
    %c0_0 = arith.constant 0 : index
    %0 = vector.load %arg0[%c0, %c0_0] : memref<8x64xf32, #tpu.memory_space<vmem>>, vector<8x64xf32>
    %1 = arith.truncf %0 : vector<8x64xf32> to vector<8x64xbf16>
    %c0_1 = arith.constant 0 : index
    %c0_2 = arith.constant 0 : index
    %2 = vector.load %arg2[%c0_1, %c0_2] : memref<64x128xbf16, #tpu.memory_space<vmem>>, vector<64x128xbf16>
    %cst = arith.constant dense<0.000000e+00> : vector<8x128xf32>
    %3 = tpu.matmul %1, %2, %cst {dimension_numbers = #tpu.dot_dimension_numbers<[1], [0], [0], [1], [0, 0, 1, 1], [], []>} : vector<8x64xbf16>, vector<64x128xbf16>, vector<8x128xf32> -> vector<8x128xf32>
    %c0_3 = arith.constant 0 : index
    %c0_4 = arith.constant 0 : index
    %4 = vector.load %arg3[%c0_3, %c0_4] : memref<1x128xf32, #tpu.memory_space<vmem>>, vector<1x128xf32>
    %5 = vector.broadcast %4 : vector<1x128xf32> to vector<8x128xf32>
    %6 = arith.addf %3, %5 : vector<8x128xf32>
    %cst_5 = arith.constant 0.000000e+00 : f32
    %7 = vector.broadcast %cst_5 : f32 to vector<8x128xf32>
    %8 = arith.cmpf oge, %6, %7 : vector<8x128xf32>
    %cst_6 = arith.constant 1.000000e-01 : f32
    %9 = vector.broadcast %cst_6 : f32 to vector<8x128xf32>
    %10 = arith.mulf %9, %6 : vector<8x128xf32>
    %11 = arith.select %8, %6, %10 : vector<8x128xi1>, vector<8x128xf32>
    %c0_7 = arith.constant 0 : index
    %c0_8 = arith.constant 0 : index
    %12 = vector.load %arg9[%c0_7, %c0_8] : memref<8x128xf32, #tpu.memory_space<vmem>>, vector<8x128xf32>
    tpu.vector_store %arg9[%c0_7, %c0_8], %11 {strides = array<i32>} : memref<8x128xf32, #tpu.memory_space<vmem>>, vector<8x128xf32>,
    %c0_9 = arith.constant 0 : index
    %c0_10 = arith.constant 0 : index
    %13 = vector.load %arg1[%c0_9, %c0_10] : memref<8x128xf32, #tpu.memory_space<vmem>>, vector<8x128xf32>
    %14 = arith.addf %11, %13 : vector<8x128xf32>
    %15 = arith.truncf %14 : vector<8x128xf32> to vector<8x128xbf16>
    %c0_11 = arith.constant 0 : index
    %c0_12 = arith.constant 0 : index
    %16 = vector.load %arg4[%c0_11, %c0_12] : memref<128x128xbf16, #tpu.memory_space<vmem>>, vector<128x128xbf16>
    %cst_13 = arith.constant dense<0.000000e+00> : vector<8x128xf32>
    %17 = tpu.matmul %15, %16, %cst_13 {dimension_numbers = #tpu.dot_dimension_numbers<[1], [0], [0], [1], [0, 0, 1, 1], [], []>} : vector<8x128xbf16>, vector<128x128xbf16>, vector<8x128xf32> -> vector<8x128xf32>
    %c0_14 = arith.constant 0 : index
    %c0_15 = arith.constant 0 : index
    %18 = vector.load %arg5[%c0_14, %c0_15] : memref<1x128xf32, #tpu.memory_space<vmem>>, vector<1x128xf32>
    %19 = vector.broadcast %18 : vector<1x128xf32> to vector<8x128xf32>
    %20 = arith.addf %17, %19 : vector<8x128xf32>
    %cst_16 = arith.constant 0.000000e+00 : f32
    %21 = vector.broadcast %cst_16 : f32 to vector<8x128xf32>
    %22 = arith.cmpf oge, %20, %21 : vector<8x128xf32>
    %cst_17 = arith.constant 1.000000e-01 : f32
    %23 = vector.broadcast %cst_17 : f32 to vector<8x128xf32>
    %24 = arith.mulf %23, %20 : vector<8x128xf32>
    %25 = arith.select %22, %20, %24 : vector<8x128xi1>, vector<8x128xf32>
    %26 = arith.truncf %25 : vector<8x128xf32> to vector<8x128xbf16>
    %c0_18 = arith.constant 0 : index
    %c0_19 = arith.constant 0 : index
    %27 = vector.load %arg6[%c0_18, %c0_19] : memref<128x128xbf16, #tpu.memory_space<vmem>>, vector<128x128xbf16>
    %cst_20 = arith.constant dense<0.000000e+00> : vector<8x128xf32>
    %28 = tpu.matmul %26, %27, %cst_20 {dimension_numbers = #tpu.dot_dimension_numbers<[1], [0], [0], [1], [0, 0, 1, 1], [], []>} : vector<8x128xbf16>, vector<128x128xbf16>, vector<8x128xf32> -> vector<8x128xf32>
    %c0_21 = arith.constant 0 : index
    %c0_22 = arith.constant 0 : index
    %29 = vector.load %arg7[%c0_21, %c0_22] : memref<1x128xf32, #tpu.memory_space<vmem>>, vector<1x128xf32>
    %30 = vector.broadcast %29 : vector<1x128xf32> to vector<8x128xf32>
    %31 = arith.addf %28, %30 : vector<8x128xf32>
    %c0_23 = arith.constant 0 : index
    %c0_24 = arith.constant 0 : index
    %32 = vector.load %arg8[%c0_23, %c0_24] : memref<8x128xf32, #tpu.memory_space<vmem>>, vector<8x128xf32>
    tpu.vector_store %arg8[%c0_23, %c0_24], %31 {strides = array<i32>} : memref<8x128xf32, #tpu.memory_space<vmem>>, vector<8x128xf32>,
    return
  }
}

</mosaic_0001>

<llo_original>
// kernel: tpu_custom_call.1
$region0: #{tpu_custom_call.1}
  #allocation0 [shape = 'u32[]', space=smem, size = 0x4, offset = 0x4, fixed_abs, tag = 'smem constant byte address 0x4 - core index']
  #allocation1 [shape = 'u32[144,128]{1,0:T(1,128)}', space=vmem, size = 0x12000, scoped, tag = 'internal scratch']
  %s0 = inlined_call_operand.hbm [shape: f32[8,64], index: 0, kind: input, shape index: {}]
  %s1 = inlined_call_operand.hbm [shape: f32[8,128], index: 1, kind: input, shape index: {}]
  %s2 = inlined_call_operand.hbm [shape: bf16[64,128], index: 2, kind: input, shape index: {}]
  %s3 = inlined_call_operand.vmem [shape: f32[1,128], index: 3, kind: input, shape index: {}]
  %s4 = inlined_call_operand.hbm [shape: bf16[128,128], index: 4, kind: input, shape index: {}]
  %s5 = inlined_call_operand.vmem [shape: f32[1,128], index: 5, kind: input, shape index: {}]
  %s6 = inlined_call_operand.hbm [shape: bf16[128,128], index: 6, kind: input, shape index: {}]
  %s7 = inlined_call_operand.vmem [shape: f32[1,128], index: 7, kind: input, shape index: {}]
  %s8 = inlined_call_operand.hbm [shape: f32[8,128], index: 8, kind: output, shape index: {0}]
  %s9 = inlined_call_operand.hbm [shape: f32[8,128], index: 9, kind: output, shape index: {1}]
  %10 = xla_tuple %s8, %s9
  %s11 = sld [smem:[#allocation0]]
  $region70: #{tpu_custom_call.1} parent=0
    _
  %s13 = ssub.s32 1, %s11
  %s14 = scalar_select 0, %s13, %s11
  $region1: #{tpu_custom_call.1} parent=0
    #allocation2 [shape = 'u8[4096]{0}', space=vmem, size = 0x1000, scoped, tag = 'input window, operand 0, single buffered']
    #allocation3 [shape = 's32[1]{0}', space=sflag, size = 0x4, scoped, tag = 'scoped memory for tpu_custom_call.1']
    #allocation4 [shape = 's32[1]{0}', space=sflag, size = 0x4, scoped, tag = 'scoped memory for tpu_custom_call.1']
    #allocation5 [shape = 'u8[4096]{0}', space=vmem, size = 0x1000, scoped, tag = 'input window, operand 1, single buffered']
    #allocation6 [shape = 's32[1]{0}', space=sflag, size = 0x4, scoped, tag = 'scoped memory for tpu_custom_call.1']
    #allocation7 [shape = 'u8[16384]{0}', space=vmem, size = 0x4000, scoped, tag = 'input window, operand 2, single buffered']
    #allocation8 [shape = 'u8[32768]{0}', space=vmem, size = 0x8000, scoped, tag = 'input window, operand 4, single buffered']
    #allocation9 [shape = 's32[1]{0}', space=sflag, size = 0x4, scoped, tag = 'scoped memory for tpu_custom_call.1']
    #allocation10 [shape = 'u8[32768]{0}', space=vmem, size = 0x8000, scoped, tag = 'input window, operand 6, single buffered']
    #allocation11 [shape = 'u8[4096]{0}', space=vmem, size = 0x1000, scoped, tag = 'output window, operand 0, single buffered']
    #allocation12 [shape = 'u8[4096]{0}', space=vmem, size = 0x1000, scoped, tag = 'output window, operand 1, single buffered']
    #allocation13 [shape = 's32[1]{0}', space=sflag, size = 0x4, scoped, tag = 'scoped memory for tpu_custom_call.1']
    %15 = vsyncpa [#allocation3], 0
    %16 = vsyncpa [#allocation6], 0
    %17 = vsyncpa [#allocation9], 0
    %18 = vsyncpa [#allocation4], 0
    %19 = vsyncpa [#allocation13], 0
    // Predicated region
    $region2: #{tpu_custom_call.1} parent=1 // pred_check
      _
    $region3: #{tpu_custom_call.1} parent=1 // pred_check_branch
      %21 = sbr.rel (0) target = $region5
    $region4: #{tpu_custom_call.1} parent=1 // pred_region
      %s23 = ssub.s32 128, 128
      %24 = vsyncadd [#allocation3], %s23
      %s26 = sshll.u32 [#allocation2], 4
      %s27 = int_to_ptr.vmem [resolvable:$true] %s26
      %29 = dma.hbm_to_vmem [thread:$0]  %s0, 128, %s27, [#allocation3]
    $region5: #{tpu_custom_call.1} parent=1 // pred_fallthru
      _
    // Predicated region
    $region6: #{tpu_custom_call.1} parent=1 // pred_check
      _
    $region7: #{tpu_custom_call.1} parent=1 // pred_check_branch
      %31 = sbr.rel (0) target = $region9
    $region8: #{tpu_custom_call.1} parent=1 // pred_region
      %s33 = ssub.s32 128, 128
      %34 = vsyncadd [#allocation6], %s33
      %s36 = sshll.u32 [#allocation5], 4
      %s37 = int_to_ptr.vmem [resolvable:$true] %s36
      %39 = dma.hbm_to_vmem [thread:$0]  %s1, 128, %s37, [#allocation6]
    $region9: #{tpu_custom_call.1} parent=1 // pred_fallthru
      _
    // Predicated region
    $region10: #{tpu_custom_call.1} parent=1 // pred_check
      _
    $region11: #{tpu_custom_call.1} parent=1 // pred_check_branch
      %41 = sbr.rel (0) target = $region13
    $region12: #{tpu_custom_call.1} parent=1 // pred_region
      %s43 = ssub.s32 512, 512
      %44 = vsyncadd [#allocation6], %s43
      %s45 = sshll.u32 [#allocation7], 4
      %s46 = int_to_ptr.vmem [resolvable:$true] %s45
      %51 = dma.hbm_to_vmem [thread:$0]  %s2, 512, %s46, [#allocation6], 64, 64, 4
    $region13: #{tpu_custom_call.1} parent=1 // pred_fallthru
      _
    // Predicated region
    $region14: #{tpu_custom_call.1} parent=1 // pred_check
      _
    $region15: #{tpu_custom_call.1} parent=1 // pred_check_branch
      %53 = sbr.rel (0) target = $region17
    $region16: #{tpu_custom_call.1} parent=1 // pred_region
      _
    $region17: #{tpu_custom_call.1} parent=1 // pred_fallthru
      _
    // Predicated region
    $region18: #{tpu_custom_call.1} parent=1 // pred_check
      _
    $region19: #{tpu_custom_call.1} parent=1 // pred_check_branch
      %55 = sbr.rel (0) target = $region21
    $region20: #{tpu_custom_call.1} parent=1 // pred_region
      %s57 = ssub.s32 1024, 1024
      %58 = vsyncadd [#allocation9], %s57
      %s59 = sshll.u32 [#allocation8], 4
      %s60 = int_to_ptr.vmem [resolvable:$true] %s59
      %65 = dma.hbm_to_vmem [thread:$0]  %s4, 1024, %s60, [#allocation9], 64, 64, 4
    $region21: #{tpu_custom_call.1} parent=1 // pred_fallthru
      _
    // Predicated region
    $region22: #{tpu_custom_call.1} parent=1 // pred_check
      _
    $region23: #{tpu_custom_call.1} parent=1 // pred_check_branch
      %67 = sbr.rel (0) target = $region25
    $region24: #{tpu_custom_call.1} parent=1 // pred_region
      _
    $region25: #{tpu_custom_call.1} parent=1 // pred_fallthru
      _
    // Predicated region
    $region26: #{tpu_custom_call.1} parent=1 // pred_check
      _
    $region27: #{tpu_custom_call.1} parent=1 // pred_check_branch
      %69 = sbr.rel (0) target = $region29
    $region28: #{tpu_custom_call.1} parent=1 // pred_region
      %s71 = ssub.s32 1024, 1024
      %72 = vsyncadd [#allocation9], %s71
      %s73 = sshll.u32 [#allocation10], 4
      %s74 = int_to_ptr.vmem [resolvable:$true] %s73
      %79 = dma.hbm_to_vmem [thread:$0]  %s6, 1024, %s74, [#allocation9], 64, 64, 4
    $region29: #{tpu_custom_call.1} parent=1 // pred_fallthru
      _
    // Predicated region
    $region30: #{tpu_custom_call.1} parent=1 // pred_check
      _
    $region31: #{tpu_custom_call.1} parent=1 // pred_check_branch
      %81 = sbr.rel (0) target = $region33
    $region32: #{tpu_custom_call.1} parent=1 // pred_region
      _
    $region33: #{tpu_custom_call.1} parent=1 // pred_fallthru
      _
    // Predicated region
    $region34: #{tpu_custom_call.1} parent=1 // pred_check
      _
    $region35: #{tpu_custom_call.1} parent=1 // pred_check_branch
      %83 = sbr.rel (0) target = $region37
    $region36: #{tpu_custom_call.1} parent=1 // pred_region
      %84 = dma.done [#allocation3], 128
    $region37: #{tpu_custom_call.1} parent=1 // pred_fallthru
      _
    // Predicated region
    $region38: #{tpu_custom_call.1} parent=1 // pred_check
      _
    $region39: #{tpu_custom_call.1} parent=1 // pred_check_branch
      %86 = sbr.rel (0) target = $region41
    $region40: #{tpu_custom_call.1} parent=1 // pred_region
      %87 = dma.done [#allocation6], 128
    $region41: #{tpu_custom_call.1} parent=1 // pred_fallthru
      _
    // Predicated region
    $region42: #{tpu_custom_call.1} parent=1 // pred_check
      _
    $region43: #{tpu_custom_call.1} parent=1 // pred_check_branch
      %89 = sbr.rel (0) target = $region45
    $region44: #{tpu_custom_call.1} parent=1 // pred_region
      %90 = dma.done [#allocation6], 512
    $region45: #{tpu_custom_call.1} parent=1 // pred_fallthru
      _
    // Predicated region
    $region46: #{tpu_custom_call.1} parent=1 // pred_check
      _
    $region47: #{tpu_custom_call.1} parent=1 // pred_check_branch
      %92 = sbr.rel (0) target = $region49
    $region48: #{tpu_custom_call.1} parent=1 // pred_region
      %93 = dma.done [#allocation9], 1024
    $region49: #{tpu_custom_call.1} parent=1 // pred_fallthru
      _
    // Predicated region
    $region50: #{tpu_custom_call.1} parent=1 // pred_check
      _
    $region51: #{tpu_custom_call.1} parent=1 // pred_check_branch
      %95 = sbr.rel (0) target = $region53
    $region52: #{tpu_custom_call.1} parent=1 // pred_region
      %96 = dma.done [#allocation9], 1024
    $region53: #{tpu_custom_call.1} parent=1 // pred_fallthru
      _
    %v98 = vld [vmem:[#allocation2] sm:$0xff]
    %v99 = vpack.c.bf16 %v98, %v98
    %v100 = vld [vmem:[#allocation7] sm:$0xf]
    %v101 = vld [vmem:[#allocation7 + $0x4] sm:$0xf]
    %v102 = vld [vmem:[#allocation7 + $0x8] sm:$0xf]
    %v103 = vld [vmem:[#allocation7 + $0xc] sm:$0xf]
    %v104 = vld [vmem:[#allocation7 + $0x10] sm:$0xf]
    %v105 = vld [vmem:[#allocation7 + $0x14] sm:$0xf]
    %v106 = vld [vmem:[#allocation7 + $0x18] sm:$0xf]
    %v107 = vld [vmem:[#allocation7 + $0x1c] sm:$0xf]
    %v108 = vld [vmem:[%s3] sm:$0x1]
    %v110 = vlaneseq
    %v111 = vshrl.u32 %v110, 7
    %v112 = vsub.s32 0, %v111
    %v113 = vrot.slane %v108, %v112
    %v123 = vunpack.c.l.b16 %v100
    %v124 = vunpack.c.l.b16 %v101
    %v125 = vunpack.c.l.b16 %v102
    %v126 = vunpack.c.l.b16 %v103
    %v127 = vunpack.c.l.b16 %v104
    %v128 = vunpack.c.l.b16 %v105
    %v129 = vunpack.c.l.b16 %v106
    %v130 = vunpack.c.l.b16 %v107
    %v131 = vpack.c.b16 %v124, %v123
    %v132 = vpack.c.b16 %v126, %v125
    %v133 = vpack.c.b16 %v128, %v127
    %v134 = vpack.c.b16 %v130, %v129
    %vm139 = vcmask 523264
    %v141 = vsel %vm139, %v99, 0
    %143 = vmatprep.subr.bf16.mxu0 0
    %144 = vmatpush1.bf16.msra.mxu0 0
    %145 = vmatprep.subr.bf16.mxu0 0
    %146 = vmatpush1.bf16.msra.mxu0 0
    %147 = vmatprep.subr.bf16.mxu0 0
    %148 = vmatpush1.bf16.msra.mxu0 0
    %149 = vmatprep.subr.bf16.mxu0 0
    %150 = vmatpush1.bf16.msra.mxu0 0
    %151 = vmatprep.subr.bf16.mxu0 0
    %152 = vmatpush1.bf16.msra.mxu0 %v134
    %153 = vmatprep.subr.bf16.mxu0 0
    %154 = vmatpush1.bf16.msra.mxu0 %v133
    %155 = vmatprep.subr.bf16.mxu0 0
    %156 = vmatpush1.bf16.msra.mxu0 %v132
    %157 = vmatprep.subr.bf16.mxu0 0
    %158 = vmatpush1.bf16.msra.mxu0 %v131
    %159 = vmatprep.subr.bf16.mxu0 0
    %160 = vmatpush2.bf16.msra.mxu0 0
    %161 = vmatprep.subr.bf16.mxu0 0
    %162 = vmatpush2.bf16.msra.mxu0 0
    %163 = vmatprep.subr.bf16.mxu0 0
    %164 = vmatpush2.bf16.msra.mxu0 0
    %165 = vmatprep.subr.bf16.mxu0 0
    %166 = vmatpush2.bf16.msra.mxu0 0
    %167 = vmatprep.subr.bf16.mxu0 0
    %168 = vmatpush2.bf16.msra.mxu0 0
    %169 = vmatprep.subr.bf16.mxu0 0
    %170 = vmatpush2.bf16.msra.mxu0 0
    %171 = vmatprep.subr.bf16.mxu0 0
    %172 = vmatpush2.bf16.msra.mxu0 0
    %173 = vmatprep.subr.bf16.mxu0 0
    %174 = vmatpush2.bf16.msra.mxu0 0
    %175 = vmatprep.mubr.bf16.mxu0 0
    %176 = vmatmul.mubr.bf16.gmra.mxu0 %v141
    %v177 = vpop.f32.mrf.mxu0
    %v178 = vadd.f32 %v113, %v177
    %v179 = vpop.f32.mrf.mxu0
    %v180 = vpop.f32.mrf.mxu0
    %v181 = vpop.f32.mrf.mxu0
    %182 = vdwg.mxu0
    %vm183 = vcmp.ge.f32.partialorder %v178, 0.0
    %v184 = vmul.f32 %v178, 0.1
    %v185 = vsel %vm183, %v178, %v184
    %186 = vst [vmem:[#allocation12] sm:$0xff] %v185
    %v187 = vld [vmem:[#allocation5] sm:$0xff]
    %v188 = vadd.f32 %v185, %v187
    %v189 = vpack.c.bf16 %v188, %v188
    %v190 = vld [vmem:[#allocation8] sm:$0xf]
    %v191 = vld [vmem:[#allocation8 + $0x4] sm:$0xf]
    %v192 = vld [vmem:[#allocation8 + $0x8] sm:$0xf]
    %v193 = vld [vmem:[#allocation8 + $0xc] sm:$0xf]
    %v194 = vld [vmem:[#allocation8 + $0x10] sm:$0xf]
    %v195 = vld [vmem:[#allocation8 + $0x14] sm:$0xf]
    %v196 = vld [vmem:[#allocation8 + $0x18] sm:$0xf]
    %v197 = vld [vmem:[#allocation8 + $0x1c] sm:$0xf]
    %v198 = vld [vmem:[#allocation8 + $0x20] sm:$0xf]
    %v199 = vld [vmem:[#allocation8 + $0x24] sm:$0xf]
    %v200 = vld [vmem:[#allocation8 + $0x28] sm:$0xf]
    %v201 = vld [vmem:[#allocation8 + $0x2c] sm:$0xf]
    %v202 = vld [vmem:[#allocation8 + $0x30] sm:$0xf]
    %v203 = vld [vmem:[#allocation8 + $0x34] sm:$0xf]
    %v204 = vld [vmem:[#allocation8 + $0x38] sm:$0xf]
    %v205 = vld [vmem:[#allocation8 + $0x3c] sm:$0xf]
    %v206 = vld [vmem:[%s5] sm:$0x1]
    %v208 = vlaneseq
    %v209 = vshrl.u32 %v208, 7
    %v210 = vsub.s32 0, %v209
    %v211 = vrot.slane %v206, %v210
    %v229 = vunpack.c.l.b16 %v190
    %v230 = vunpack.c.l.b16 %v191
    %v231 = vunpack.c.l.b16 %v192
    %v232 = vunpack.c.l.b16 %v193
    %v233 = vunpack.c.l.b16 %v194
    %v234 = vunpack.c.l.b16 %v195
    %v235 = vunpack.c.l.b16 %v196
    %v236 = vunpack.c.l.b16 %v197
    %v237 = vunpack.c.l.b16 %v198
    %v238 = vunpack.c.l.b16 %v199
    %v239 = vunpack.c.l.b16 %v200
    %v240 = vunpack.c.l.b16 %v201
    %v241 = vunpack.c.l.b16 %v202
    %v242 = vunpack.c.l.b16 %v203
    %v243 = vunpack.c.l.b16 %v204
    %v244 = vunpack.c.l.b16 %v205
    %v245 = vpack.c.b16 %v230, %v229
    %v246 = vpack.c.b16 %v232, %v231
    %v247 = vpack.c.b16 %v234, %v233
    %v248 = vpack.c.b16 %v236, %v235
    %v249 = vpack.c.b16 %v238, %v237
    %v250 = vpack.c.b16 %v240, %v239
    %v251 = vpack.c.b16 %v242, %v241
    %v252 = vpack.c.b16 %v244, %v243
    %261 = vmatprep.subr.bf16.mxu0 0
    %262 = vmatpush1.bf16.msra.mxu0 %v252
    %263 = vmatprep.subr.bf16.mxu0 0
    %264 = vmatpush1.bf16.msra.mxu0 %v251
    %265 = vmatprep.subr.bf16.mxu0 0
    %266 = vmatpush1.bf16.msra.mxu0 %v250
    %267 = vmatprep.subr.bf16.mxu0 0
    %268 = vmatpush1.bf16.msra.mxu0 %v249
    %269 = vmatprep.subr.bf16.mxu0 0
    %270 = vmatpush1.bf16.msra.mxu0 %v248
    %271 = vmatprep.subr.bf16.mxu0 0
    %272 = vmatpush1.bf16.msra.mxu0 %v247
    %273 = vmatprep.subr.bf16.mxu0 0
    %274 = vmatpush1.bf16.msra.mxu0 %v246
    %275 = vmatprep.subr.bf16.mxu0 0
    %276 = vmatpush1.bf16.msra.mxu0 %v245
    %277 = vmatprep.subr.bf16.mxu0 0
    %278 = vmatpush2.bf16.msra.mxu0 0
    %279 = vmatprep.subr.bf16.mxu0 0
    %280 = vmatpush2.bf16.msra.mxu0 0
    %281 = vmatprep.subr.bf16.mxu0 0
    %282 = vmatpush2.bf16.msra.mxu0 0
    %283 = vmatprep.subr.bf16.mxu0 0
    %284 = vmatpush2.bf16.msra.mxu0 0
    %285 = vmatprep.subr.bf16.mxu0 0
    %286 = vmatpush2.bf16.msra.mxu0 0
    %287 = vmatprep.subr.bf16.mxu0 0
    %288 = vmatpush2.bf16.msra.mxu0 0
    %289 = vmatprep.subr.bf16.mxu0 0
    %290 = vmatpush2.bf16.msra.mxu0 0
    %291 = vmatprep.subr.bf16.mxu0 0
    %292 = vmatpush2.bf16.msra.mxu0 0
    %293 = vmatprep.mubr.bf16.mxu0 0
    %294 = vmatmul.mubr.bf16.gmra.mxu0 %v189
    %v295 = vpop.f32.mrf.mxu0
    %v296 = vadd.f32 %v211, %v295
    %v297 = vpop.f32.mrf.mxu0
    %v298 = vpop.f32.mrf.mxu0
    %v299 = vpop.f32.mrf.mxu0
    %300 = vdwg.mxu0
    %vm301 = vcmp.ge.f32.partialorder %v296, 0.0
    %v302 = vmul.f32 %v296, 0.1
    %v303 = vsel %vm301, %v296, %v302
    %v304 = vpack.c.bf16 %v303, %v303
    %v305 = vld [vmem:[#allocation10] sm:$0xf]
    %v306 = vld [vmem:[#allocation10 + $0x4] sm:$0xf]
    %v307 = vld [vmem:[#allocation10 + $0x8] sm:$0xf]
    %v308 = vld [vmem:[#allocation10 + $0xc] sm:$0xf]
    %v309 = vld [vmem:[#allocation10 + $0x10] sm:$0xf]
    %v310 = vld [vmem:[#allocation10 + $0x14] sm:$0xf]
    %v311 = vld [vmem:[#allocation10 + $0x18] sm:$0xf]
    %v312 = vld [vmem:[#allocation10 + $0x1c] sm:$0xf]
    %v313 = vld [vmem:[#allocation10 + $0x20] sm:$0xf]
    %v314 = vld [vmem:[#allocation10 + $0x24] sm:$0xf]
    %v315 = vld [vmem:[#allocation10 + $0x28] sm:$0xf]
    %v316 = vld [vmem:[#allocation10 + $0x2c] sm:$0xf]
    %v317 = vld [vmem:[#allocation10 + $0x30] sm:$0xf]
    %v318 = vld [vmem:[#allocation10 + $0x34] sm:$0xf]
    %v319 = vld [vmem:[#allocation10 + $0x38] sm:$0xf]
    %v320 = vld [vmem:[#allocation10 + $0x3c] sm:$0xf]
    %v321 = vld [vmem:[%s7] sm:$0x1]
    %v323 = vlaneseq
    %v324 = vshrl.u32 %v323, 7
    %v325 = vsub.s32 0, %v324
    %v326 = vrot.slane %v321, %v325
    %v344 = vunpack.c.l.b16 %v305
    %v345 = vunpack.c.l.b16 %v306
    %v346 = vunpack.c.l.b16 %v307
    %v347 = vunpack.c.l.b16 %v308
    %v348 = vunpack.c.l.b16 %v309
    %v349 = vunpack.c.l.b16 %v310
    %v350 = vunpack.c.l.b16 %v311
    %v351 = vunpack.c.l.b16 %v312
    %v352 = vunpack.c.l.b16 %v313
    %v353 = vunpack.c.l.b16 %v314
    %v354 = vunpack.c.l.b16 %v315
    %v355 = vunpack.c.l.b16 %v316
    %v356 = vunpack.c.l.b16 %v317
    %v357 = vunpack.c.l.b16 %v318
    %v358 = vunpack.c.l.b16 %v319
    %v359 = vunpack.c.l.b16 %v320
    %v360 = vpack.c.b16 %v345, %v344
    %v361 = vpack.c.b16 %v347, %v346
    %v362 = vpack.c.b16 %v349, %v348
    %v363 = vpack.c.b16 %v351, %v350
    %v364 = vpack.c.b16 %v353, %v352
    %v365 = vpack.c.b16 %v355, %v354
    %v366 = vpack.c.b16 %v357, %v356
    %v367 = vpack.c.b16 %v359, %v358
    %376 = vmatprep.subr.bf16.mxu0 0
    %377 = vmatpush1.bf16.msra.mxu0 %v367
    %378 = vmatprep.subr.bf16.mxu0 0
    %379 = vmatpush1.bf16.msra.mxu0 %v366
    %380 = vmatprep.subr.bf16.mxu0 0
    %381 = vmatpush1.bf16.msra.mxu0 %v365
    %382 = vmatprep.subr.bf16.mxu0 0
    %383 = vmatpush1.bf16.msra.mxu0 %v364
    %384 = vmatprep.subr.bf16.mxu0 0
    %385 = vmatpush1.bf16.msra.mxu0 %v363
    %386 = vmatprep.subr.bf16.mxu0 0
    %387 = vmatpush1.bf16.msra.mxu0 %v362
    %388 = vmatprep.subr.bf16.mxu0 0
    %389 = vmatpush1.bf16.msra.mxu0 %v361
    %390 = vmatprep.subr.bf16.mxu0 0
    %391 = vmatpush1.bf16.msra.mxu0 %v360
    %392 = vmatprep.subr.bf16.mxu0 0
    %393 = vmatpush2.bf16.msra.mxu0 0
    %394 = vmatprep.subr.bf16.mxu0 0
    %395 = vmatpush2.bf16.msra.mxu0 0
    %396 = vmatprep.subr.bf16.mxu0 0
    %397 = vmatpush2.bf16.msra.mxu0 0
    %398 = vmatprep.subr.bf16.mxu0 0
    %399 = vmatpush2.bf16.msra.mxu0 0
    %400 = vmatprep.subr.bf16.mxu0 0
    %401 = vmatpush2.bf16.msra.mxu0 0
    %402 = vmatprep.subr.bf16.mxu0 0
    %403 = vmatpush2.bf16.msra.mxu0 0
    %404 = vmatprep.subr.bf16.mxu0 0
    %405 = vmatpush2.bf16.msra.mxu0 0
    %406 = vmatprep.subr.bf16.mxu0 0
    %407 = vmatpush2.bf16.msra.mxu0 0
    %408 = vmatprep.mubr.bf16.mxu0 0
    %409 = vmatmul.mubr.bf16.gmra.mxu0 %v304
    %v410 = vpop.f32.mrf.mxu0
    %v411 = vadd.f32 %v326, %v410
    %v412 = vpop.f32.mrf.mxu0
    %v413 = vpop.f32.mrf.mxu0
    %v414 = vpop.f32.mrf.mxu0
    %415 = vdwg.mxu0
    %416 = vst [vmem:[#allocation11] sm:$0xff] %v411
    // Predicated region
    $region54: #{tpu_custom_call.1} parent=1 // pred_check
      _
    $region55: #{tpu_custom_call.1} parent=1 // pred_check_branch
      %418 = sbr.rel (0) target = $region57
    $region56: #{tpu_custom_call.1} parent=1 // pred_region
      %s420 = ssub.s32 128, 128
      %421 = vsyncadd [#allocation4], %s420
      %s423 = sshll.u32 [#allocation11], 4
      %s424 = int_to_ptr.vmem [resolvable:$true] %s423
      %426 = dma.vmem_to_hbm [thread:$0]  %s424, 128, %s8, [#allocation4]
    $region57: #{tpu_custom_call.1} parent=1 // pred_fallthru
      _
    // Predicated region
    $region58: #{tpu_custom_call.1} parent=1 // pred_check
      _
    $region59: #{tpu_custom_call.1} parent=1 // pred_check_branch
      %428 = sbr.rel (0) target = $region61
    $region60: #{tpu_custom_call.1} parent=1 // pred_region
      %s430 = ssub.s32 128, 128
      %431 = vsyncadd [#allocation13], %s430
      %s433 = sshll.u32 [#allocation12], 4
      %s434 = int_to_ptr.vmem [resolvable:$true] %s433
      %436 = dma.vmem_to_hbm [thread:$0]  %s434, 128, %s9, [#allocation13]
    $region61: #{tpu_custom_call.1} parent=1 // pred_fallthru
      _
    // Predicated region
    $region62: #{tpu_custom_call.1} parent=1 // pred_check
      _
    $region63: #{tpu_custom_call.1} parent=1 // pred_check_branch
      %438 = sbr.rel (0) target = $region65
    $region64: #{tpu_custom_call.1} parent=1 // pred_region
      %439 = dma.done [#allocation4], 128
    $region65: #{tpu_custom_call.1} parent=1 // pred_fallthru
      _
    // Predicated region
    $region66: #{tpu_custom_call.1} parent=1 // pred_check
      _
    $region67: #{tpu_custom_call.1} parent=1 // pred_check_branch
      %441 = sbr.rel (0) target = $region69
    $region68: #{tpu_custom_call.1} parent=1 // pred_region
      %442 = dma.done [#allocation13], 128
    $region69: #{tpu_custom_call.1} parent=1 // pred_fallthru
      _
    %443 = vsyncpa [#allocation3], 1
    %444 = vsyncpa [#allocation6], 1
    %445 = vsyncpa [#allocation9], 1
    %446 = vsyncpa [#allocation4], 1
    %447 = vsyncpa [#allocation13], 1

</llo_original>
